<compile_context>
chip_gen: v7x
topology: tpu7x:2x2x1
jax: 0.10.0
libtpu: 0.0.40
codegen_flags: <defaults>
</compile_context>

<pallas_src>
import functools

import jax
import jax.numpy as jnp
import numpy as np
from jax import lax
from jax.experimental import pallas as pl
from jax.experimental.pallas import tpu as pltpu


# ----------------------------------------------------------------------------
# Pallas kernel: fused CrossNet + MLP + final fc + sigmoid for one batch tile
# ----------------------------------------------------------------------------
def dcn_kernel(*refs, num_cross: int, num_hidden: int):
    ex_ref = refs[0]                               # (D0, BT) feature-major
    wall_ref = refs[1]                             # (C+1, D0): [w_0..w_{C-1}; fcw_c]
    cconst_ref = refs[2]                           # (C, 1): C_i = <sum_{j<i} b_j, w_i>
    mlp_refs = refs[3:3 + 2 * num_hidden]          # (w0,b0,w1,b1,...) w:(out,in) b:(out,1)
    fcwd_ref = refs[3 + 2 * num_hidden]            # (1, H_last)
    fcb_ref = refs[4 + 2 * num_hidden]             # (1, 1)  (includes fc cross const)
    out_ref = refs[5 + 2 * num_hidden]             # (1, BT)

    # Load the embedding tile once; all in-kernel math is f32 (inputs may
    # arrive as bf16 purely to halve HBM traffic on v5e).
    ex = ex_ref[...].astype(jnp.float32)           # (D0, BT)

    # ---- CrossNet, collapsed: one small MXU matmul + (1,BT) recurrence ------
    a = jnp.dot(wall_ref[...], ex,
                preferred_element_type=jnp.float32)           # (C+1, BT)
    one_plus_s = jnp.ones_like(a[0:1, :])                     # 1 + S_{-1}
    for i in range(num_cross):
        # (1+S_i) = (1+S_{i-1})*(1+A_i) + C_i
        one_plus_s = one_plus_s * (1.0 + a[i:i + 1, :]) + cconst_ref[i:i + 1, :]
    # cross contribution to the logit: (1+S_{L-1}) * <x0, fcw_c>
    logit = one_plus_s * a[num_cross:num_cross + 1, :]        # (1, BT)

    # ---- MLP tower (feature-major: h = relu(W @ h + b)); Dropout = id -------
    h = ex
    for li in range(num_hidden):
        w = mlp_refs[2 * li][...]                              # (out, in)
        b = mlp_refs[2 * li + 1][...]                          # (out, 1)
        h = jnp.maximum(
            jnp.dot(w, h, preferred_element_type=jnp.float32) + b, 0.0)

    # ---- final fc (dnn half) + bias + sigmoid; lane-dense (1, BT) store -----
    logit = logit + jnp.dot(fcwd_ref[...], h,
                            preferred_element_type=jnp.float32)
    logit = logit + fcb_ref[...]                               # (1,1) broadcast
    out_ref[...] = jax.nn.sigmoid(logit)                       # (1, BT)


# ----------------------------------------------------------------------------
# Wrapper: embedding gather (XLA glue) + algebraic pre-folding + pallas_call
# ----------------------------------------------------------------------------
def dcn_forward_pallas(x_user, x_item, x_stat, emb_table, params,
                       user_hist=None, hist_len=None, *,
                       block_b=256, io_dtype=jnp.float32):
    del user_hist, hist_len                      # DCN.forward ignores history
    cw, cb, mlp_params, fcw, fcb = params

    x = jnp.concatenate([x_user, x_item, x_stat], axis=1)   # (B, num_fields)
    B, num_fields = x.shape
    E = emb_table.shape[1]
    input_dim = num_fields * E

    assert block_b % 128 == 0, "block_b must be lane aligned (multiple of 128)"
    n_blocks = pl.cdiv(B, block_b)
    B_pad = n_blocks * block_b
    if B_pad != B:                               # ragged batch: pad, later slice
        x = jnp.pad(x, ((0, B_pad - B), (0, 0)))

    # Embedding gather stays as XLA glue, emitted feature-major (D0, B) so the
    # kernel reads fully lane-dense tiles.
    # TODO(synk): move the gather in-kernel (scalar-prefetched indices + a
    # VMEM-resident table) once Mosaic has a robust row-gather lowering; this
    # would remove the only O(B) HBM round trip.
    embed_x = emb_table[x].reshape(B_pad, input_dim).T.astype(io_dtype)

    # Final fc weight (1, input_dim + H_last): split into cross / dnn halves.
    fcw_c = fcw[:, :input_dim].astype(jnp.float32)           # (1, D0)
    fcw_d = fcw[:, input_dim:].astype(jnp.float32)           # (1, H_last)

    # Algebraic collapse of the cross net (see module docstring).
    cw32 = cw.astype(jnp.float32)
    cb32 = cb.astype(jnp.float32)
    w_all = jnp.concatenate([cw32, fcw_c], axis=0)           # (C+1, D0)
    b_cum = jnp.cumsum(cb32, axis=0)                         # (C, D0)
    b_before = jnp.concatenate(
        [jnp.zeros((1, input_dim), jnp.float32), b_cum[:-1]], axis=0)
    c_consts = jnp.sum(b_before * cw32, axis=1, keepdims=True)   # (C, 1)
    fc_const = jnp.sum(b_cum[-1] * fcw_c[0])                     # <B_{L-1}, fcw_c>
    fcb_eff = fcb.reshape(1, 1).astype(jnp.float32) + fc_const   # (1, 1)

    num_hidden = len(mlp_params)
    flat_mlp = []
    for (w, b) in mlp_params:                    # torch layout: w (out, in)
        flat_mlp.append(w.astype(jnp.float32))
        flat_mlp.append(b.reshape(-1, 1).astype(jnp.float32))

    operands = [embed_x, w_all, c_consts, *flat_mlp, fcw_d, fcb_eff]

    def full_spec(a):
        nd = a.ndim
        return pl.BlockSpec(a.shape, lambda *args, _nd=nd: (0,) * _nd)

    in_specs = ([pl.BlockSpec((input_dim, block_b), lambda i: (0, i))]
                + [full_spec(a) for a in operands[1:]])

    out = pl.pallas_call(
        functools.partial(dcn_kernel,
                          num_cross=cw.shape[0], num_hidden=num_hidden),
        out_shape=jax.ShapeDtypeStruct((1, B_pad), jnp.float32),
        grid=(n_blocks,),
        in_specs=in_specs,
        out_specs=pl.BlockSpec((1, block_b), lambda i: (0, i)),
        compiler_params=pltpu.CompilerParams(
            dimension_semantics=("parallel",)),
    )(*operands)
    return out[0, :B]                            # (B,)


# ----------------------------------------------------------------------------
# Pure-JAX reference (mirrors the PyTorch forward exactly, eval mode)
# ----------------------------------------------------------------------------
def dcn_forward_reference(x_user, x_item, x_stat, emb_table, params):
    cw, cb, mlp_params, fcw, fcb = params
    x = jnp.concatenate([x_user, x_item, x_stat], axis=1)
    B = x.shape[0]
    ex = emb_table[x].reshape(B, -1).astype(jnp.float32)

    x0, xc = ex, ex
    for i in range(cw.shape[0]):
        xw = jnp.sum(xc * cw[i][None, :], axis=1, keepdims=True)    # (B, 1)
        xc = x0 * xw + cb[i][None, :] + xc

    h = ex
    for (w, b) in mlp_params:
        h = jax.nn.relu(
            jnp.dot(h, w.T, precision=lax.Precision.HIGHEST) + b[None, :])

    final = jnp.concatenate([xc, h], axis=1)
    logit = jnp.dot(final, fcw.T, precision=lax.Precision.HIGHEST)[:, 0] + fcb[0]
    return jax.nn.sigmoid(logit)


# ----------------------------------------------------------------------------
# Main
# ----------------------------------------------------------------------------
if __name__ == "__main__":
    B = 2000             # ragged on purpose (padded to 2048 -> 8 grid steps)
    VOCAB = 1000
    E = 8                # embed_dim
    FU, FI, FS = 2, 2, 2  # user / item / stat field counts
    NUM_FIELDS = FU + FI + FS
    INPUT_DIM = NUM_FIELDS * E          # 48
    HIDDEN = (32, 16)                   # hidden_dims
    NUM_CROSS = 5
    FINAL_DIM = INPUT_DIM + HIDDEN[-1]  # 64

    key = jax.random.PRNGKey(0)
    keys = jax.random.split(key, 12)

    def lin(kw, kb, fan_in, fan_out):   # torch nn.Linear layout: w (out, in)
        lim = 1.0 / np.sqrt(fan_in)
        w = jax.random.uniform(kw, (fan_out, fan_in), jnp.float32, -lim, lim)
        b = jax.random.uniform(kb, (fan_out,), jnp.float32, -lim, lim)
        return w, b

    emb_table = jax.random.normal(keys[0], (VOCAB, E), jnp.float32) * 0.1

    lim = 1.0 / np.sqrt(INPUT_DIM)
    cw = jax.random.uniform(keys[1], (NUM_CROSS, INPUT_DIM), jnp.float32, -lim, lim)
    cb = jax.random.uniform(keys[2], (NUM_CROSS, INPUT_DIM), jnp.float32, -0.1, 0.1)

    m1w, m1b = lin(keys[3], keys[4], INPUT_DIM, HIDDEN[0])
    m2w, m2b = lin(keys[5], keys[6], HIDDEN[0], HIDDEN[1])
    fcw, fcb = lin(keys[7], keys[8], FINAL_DIM, 1)    # (1, FINAL_DIM), (1,)

    params = (cw, cb, ((m1w, m1b), (m2w, m2b)), fcw, fcb)

    x_user = jax.random.randint(keys[9], (B, FU), 0, VOCAB, jnp.int32)
    x_item = jax.random.randint(keys[10], (B, FI), 0, VOCAB, jnp.int32)
    x_stat = jax.random.randint(keys[11], (B, FS), 0, VOCAB, jnp.int32)

    ref = jax.block_until_ready(
        dcn_forward_reference(x_user, x_item, x_stat, emb_table, params))

    out = jax.block_until_ready(
        dcn_forward_pallas(x_user, x_item, x_stat, emb_table, params,
                           block_b=256, io_dtype=jnp.float32))
    assert out.shape == (B,)
    np.testing.assert_allclose(np.asarray(out), np.asarray(ref),
                               rtol=5e-3, atol=5e-3)

    print("KERNEL_OK")
</pallas_src>

<mosaic_0001>
module attributes {stable_mosaic.version = 11 : i64} {
  func.func @dcn_kernel(%arg0: i32, %arg1: memref<48x256xf32, #tpu.memory_space<vmem>>, %arg2: memref<6x48xf32, #tpu.memory_space<vmem>>, %arg3: memref<5x1xf32, #tpu.memory_space<vmem>>, %arg4: memref<32x48xf32, #tpu.memory_space<vmem>>, %arg5: memref<32x1xf32, #tpu.memory_space<vmem>>, %arg6: memref<16x32xf32, #tpu.memory_space<vmem>>, %arg7: memref<16x1xf32, #tpu.memory_space<vmem>>, %arg8: memref<1x16xf32, #tpu.memory_space<vmem>>, %arg9: memref<1x1xf32, #tpu.memory_space<vmem>>, %arg10: memref<1x256xf32, #tpu.memory_space<vmem>>) attributes {dimension_semantics = [#tpu.dimension_semantics<parallel>], iteration_bounds = array<i64: 8>, scalar_prefetch = 0 : i64, scratch_operands = 0 : i64, tpu.core_type = #tpu.core_type<tc>, window_params = [{transform_indices = @transform_0, window_bounds = array<i64: 48, 256>}, {pipeline_mode = #tpu.pipeline_mode<synchronous>, transform_indices = @transform_1, window_bounds = array<i64: 6, 48>}, {pipeline_mode = #tpu.pipeline_mode<synchronous>, transform_indices = @transform_2, window_bounds = array<i64: 5, 1>}, {pipeline_mode = #tpu.pipeline_mode<synchronous>, transform_indices = @transform_3, window_bounds = array<i64: 32, 48>}, {pipeline_mode = #tpu.pipeline_mode<synchronous>, transform_indices = @transform_4, window_bounds = array<i64: 32, 1>}, {pipeline_mode = #tpu.pipeline_mode<synchronous>, transform_indices = @transform_5, window_bounds = array<i64: 16, 32>}, {pipeline_mode = #tpu.pipeline_mode<synchronous>, transform_indices = @transform_6, window_bounds = array<i64: 16, 1>}, {pipeline_mode = #tpu.pipeline_mode<synchronous>, transform_indices = @transform_7, window_bounds = array<i64: 1, 16>}, {pipeline_mode = #tpu.pipeline_mode<synchronous>, transform_indices = @transform_8, window_bounds = array<i64: 1, 1>}, {transform_indices = @transform_9, window_bounds = array<i64: 1, 256>}]} {
    %c0 = arith.constant 0 : index
    %c0_0 = arith.constant 0 : index
    %0 = vector.load %arg1[%c0, %c0_0] : memref<48x256xf32, #tpu.memory_space<vmem>>, vector<48x256xf32>
    %c0_1 = arith.constant 0 : index
    %c0_2 = arith.constant 0 : index
    %1 = vector.load %arg2[%c0_1, %c0_2] : memref<6x48xf32, #tpu.memory_space<vmem>>, vector<6x48xf32>
    %cst = arith.constant dense<0.000000e+00> : vector<6x256xf32>
    %2 = tpu.matmul %1, %0, %cst {dimension_numbers = #tpu.dot_dimension_numbers<[1], [0], [0], [1], [0, 0, 1, 1], [], []>} : vector<6x48xf32>, vector<48x256xf32>, vector<6x256xf32> -> vector<6x256xf32>
    %cst_3 = arith.constant 1.000000e+00 : f32
    %3 = vector.broadcast %cst_3 : f32 to vector<1x256xf32>
    %4 = vector.extract_strided_slice %2 {offsets = [0, 0], sizes = [1, 256], strides = [1, 1]} : vector<6x256xf32> to vector<1x256xf32>
    %cst_4 = arith.constant 1.000000e+00 : f32
    %5 = vector.broadcast %cst_4 : f32 to vector<1x256xf32>
    %6 = arith.addf %5, %4 : vector<1x256xf32>
    %7 = arith.mulf %3, %6 : vector<1x256xf32>
    %c0_5 = arith.constant 0 : index
    %c0_6 = arith.constant 0 : index
    %8 = vector.load %arg3[%c0_5, %c0_6] : memref<5x1xf32, #tpu.memory_space<vmem>>, vector<1x1xf32>
    %9 = vector.broadcast %8 : vector<1x1xf32> to vector<1x256xf32>
    %10 = arith.addf %7, %9 : vector<1x256xf32>
    %11 = vector.extract_strided_slice %2 {offsets = [1, 0], sizes = [1, 256], strides = [1, 1]} : vector<6x256xf32> to vector<1x256xf32>
    %cst_7 = arith.constant 1.000000e+00 : f32
    %12 = vector.broadcast %cst_7 : f32 to vector<1x256xf32>
    %13 = arith.addf %12, %11 : vector<1x256xf32>
    %14 = arith.mulf %10, %13 : vector<1x256xf32>
    %c1 = arith.constant 1 : index
    %c0_8 = arith.constant 0 : index
    %15 = vector.load %arg3[%c1, %c0_8] : memref<5x1xf32, #tpu.memory_space<vmem>>, vector<1x1xf32>
    %16 = vector.broadcast %15 : vector<1x1xf32> to vector<1x256xf32>
    %17 = arith.addf %14, %16 : vector<1x256xf32>
    %18 = vector.extract_strided_slice %2 {offsets = [2, 0], sizes = [1, 256], strides = [1, 1]} : vector<6x256xf32> to vector<1x256xf32>
    %cst_9 = arith.constant 1.000000e+00 : f32
    %19 = vector.broadcast %cst_9 : f32 to vector<1x256xf32>
    %20 = arith.addf %19, %18 : vector<1x256xf32>
    %21 = arith.mulf %17, %20 : vector<1x256xf32>
    %c2 = arith.constant 2 : index
    %c0_10 = arith.constant 0 : index
    %22 = vector.load %arg3[%c2, %c0_10] : memref<5x1xf32, #tpu.memory_space<vmem>>, vector<1x1xf32>
    %23 = vector.broadcast %22 : vector<1x1xf32> to vector<1x256xf32>
    %24 = arith.addf %21, %23 : vector<1x256xf32>
    %25 = vector.extract_strided_slice %2 {offsets = [3, 0], sizes = [1, 256], strides = [1, 1]} : vector<6x256xf32> to vector<1x256xf32>
    %cst_11 = arith.constant 1.000000e+00 : f32
    %26 = vector.broadcast %cst_11 : f32 to vector<1x256xf32>
    %27 = arith.addf %26, %25 : vector<1x256xf32>
    %28 = arith.mulf %24, %27 : vector<1x256xf32>
    %c3 = arith.constant 3 : index
    %c0_12 = arith.constant 0 : index
    %29 = vector.load %arg3[%c3, %c0_12] : memref<5x1xf32, #tpu.memory_space<vmem>>, vector<1x1xf32>
    %30 = vector.broadcast %29 : vector<1x1xf32> to vector<1x256xf32>
    %31 = arith.addf %28, %30 : vector<1x256xf32>
    %32 = vector.extract_strided_slice %2 {offsets = [4, 0], sizes = [1, 256], strides = [1, 1]} : vector<6x256xf32> to vector<1x256xf32>
    %cst_13 = arith.constant 1.000000e+00 : f32
    %33 = vector.broadcast %cst_13 : f32 to vector<1x256xf32>
    %34 = arith.addf %33, %32 : vector<1x256xf32>
    %35 = arith.mulf %31, %34 : vector<1x256xf32>
    %c4 = arith.constant 4 : index
    %c0_14 = arith.constant 0 : index
    %36 = vector.load %arg3[%c4, %c0_14] : memref<5x1xf32, #tpu.memory_space<vmem>>, vector<1x1xf32>
    %37 = vector.broadcast %36 : vector<1x1xf32> to vector<1x256xf32>
    %38 = arith.addf %35, %37 : vector<1x256xf32>
    %39 = vector.extract_strided_slice %2 {offsets = [5, 0], sizes = [1, 256], strides = [1, 1]} : vector<6x256xf32> to vector<1x256xf32>
    %40 = arith.mulf %38, %39 : vector<1x256xf32>
    %c0_15 = arith.constant 0 : index
    %c0_16 = arith.constant 0 : index
    %41 = vector.load %arg4[%c0_15, %c0_16] : memref<32x48xf32, #tpu.memory_space<vmem>>, vector<32x48xf32>
    %c0_17 = arith.constant 0 : index
    %c0_18 = arith.constant 0 : index
    %42 = vector.load %arg5[%c0_17, %c0_18] : memref<32x1xf32, #tpu.memory_space<vmem>>, vector<32x1xf32>
    %cst_19 = arith.constant dense<0.000000e+00> : vector<32x256xf32>
    %43 = tpu.matmul %41, %0, %cst_19 {dimension_numbers = #tpu.dot_dimension_numbers<[1], [0], [0], [1], [0, 0, 1, 1], [], []>} : vector<32x48xf32>, vector<48x256xf32>, vector<32x256xf32> -> vector<32x256xf32>
    %44 = vector.broadcast %42 : vector<32x1xf32> to vector<32x256xf32>
    %45 = arith.addf %43, %44 : vector<32x256xf32>
    %cst_20 = arith.constant 0.000000e+00 : f32
    %46 = vector.broadcast %cst_20 : f32 to vector<32x256xf32>
    %47 = arith.maximumf %45, %46 : vector<32x256xf32>
    %c0_21 = arith.constant 0 : index
    %c0_22 = arith.constant 0 : index
    %48 = vector.load %arg6[%c0_21, %c0_22] : memref<16x32xf32, #tpu.memory_space<vmem>>, vector<16x32xf32>
    %c0_23 = arith.constant 0 : index
    %c0_24 = arith.constant 0 : index
    %49 = vector.load %arg7[%c0_23, %c0_24] : memref<16x1xf32, #tpu.memory_space<vmem>>, vector<16x1xf32>
    %cst_25 = arith.constant dense<0.000000e+00> : vector<16x256xf32>
    %50 = tpu.matmul %48, %47, %cst_25 {dimension_numbers = #tpu.dot_dimension_numbers<[1], [0], [0], [1], [0, 0, 1, 1], [], []>} : vector<16x32xf32>, vector<32x256xf32>, vector<16x256xf32> -> vector<16x256xf32>
    %51 = vector.broadcast %49 : vector<16x1xf32> to vector<16x256xf32>
    %52 = arith.addf %50, %51 : vector<16x256xf32>
    %cst_26 = arith.constant 0.000000e+00 : f32
    %53 = vector.broadcast %cst_26 : f32 to vector<16x256xf32>
    %54 = arith.maximumf %52, %53 : vector<16x256xf32>
    %c0_27 = arith.constant 0 : index
    %c0_28 = arith.constant 0 : index
    %55 = vector.load %arg8[%c0_27, %c0_28] : memref<1x16xf32, #tpu.memory_space<vmem>>, vector<1x16xf32>
    %cst_29 = arith.constant dense<0.000000e+00> : vector<1x256xf32>
    %56 = tpu.matmul %55, %54, %cst_29 {dimension_numbers = #tpu.dot_dimension_numbers<[1], [0], [0], [1], [0, 0, 1, 1], [], []>} : vector<1x16xf32>, vector<16x256xf32>, vector<1x256xf32> -> vector<1x256xf32>
    %57 = arith.addf %40, %56 : vector<1x256xf32>
    %c0_30 = arith.constant 0 : index
    %c0_31 = arith.constant 0 : index
    %58 = vector.load %arg9[%c0_30, %c0_31] : memref<1x1xf32, #tpu.memory_space<vmem>>, vector<1x1xf32>
    %59 = vector.broadcast %58 : vector<1x1xf32> to vector<1x256xf32>
    %60 = arith.addf %57, %59 : vector<1x256xf32>
    %61 = arith.negf %60 : vector<1x256xf32>
    %62 = math.exp %61 : vector<1x256xf32>
    %cst_32 = arith.constant 1.000000e+00 : f32
    %63 = vector.broadcast %cst_32 : f32 to vector<1x256xf32>
    %64 = arith.addf %63, %62 : vector<1x256xf32>
    %65 = arith.divf %63, %64 : vector<1x256xf32>
    %c0_33 = arith.constant 0 : index
    %c0_34 = arith.constant 0 : index
    %66 = vector.load %arg10[%c0_33, %c0_34] : memref<1x256xf32, #tpu.memory_space<vmem>>, vector<1x256xf32>
    tpu.vector_store %arg10[%c0_33, %c0_34], %65 {strides = array<i32>} : memref<1x256xf32, #tpu.memory_space<vmem>>, vector<1x256xf32>,
    return
  }
  func.func @transform_0(%arg0: i32) -> (i32, i32) {
    %c0_i32 = arith.constant 0 : i32
    %c0_i32_0 = arith.constant 0 : i32
    return %c0_i32, %arg0 : i32, i32
  }
  func.func @transform_1(%arg0: i32) -> (i32, i32) {
    %c0_i32 = arith.constant 0 : i32
    %c0_i32_0 = arith.constant 0 : i32
    %c0_i32_1 = arith.constant 0 : i32
    return %c0_i32, %c0_i32_0 : i32, i32
  }
  func.func @transform_2(%arg0: i32) -> (i32, i32) {
    %c0_i32 = arith.constant 0 : i32
    %c0_i32_0 = arith.constant 0 : i32
    %c0_i32_1 = arith.constant 0 : i32
    return %c0_i32, %c0_i32_0 : i32, i32
  }
  func.func @transform_3(%arg0: i32) -> (i32, i32) {
    %c0_i32 = arith.constant 0 : i32
    %c0_i32_0 = arith.constant 0 : i32
    %c0_i32_1 = arith.constant 0 : i32
    return %c0_i32, %c0_i32_0 : i32, i32
  }
  func.func @transform_4(%arg0: i32) -> (i32, i32) {
    %c0_i32 = arith.constant 0 : i32
    %c0_i32_0 = arith.constant 0 : i32
    %c0_i32_1 = arith.constant 0 : i32
    return %c0_i32, %c0_i32_0 : i32, i32
  }
  func.func @transform_5(%arg0: i32) -> (i32, i32) {
    %c0_i32 = arith.constant 0 : i32
    %c0_i32_0 = arith.constant 0 : i32
    %c0_i32_1 = arith.constant 0 : i32
    return %c0_i32, %c0_i32_0 : i32, i32
  }
  func.func @transform_6(%arg0: i32) -> (i32, i32) {
    %c0_i32 = arith.constant 0 : i32
    %c0_i32_0 = arith.constant 0 : i32
    %c0_i32_1 = arith.constant 0 : i32
    return %c0_i32, %c0_i32_0 : i32, i32
  }
  func.func @transform_7(%arg0: i32) -> (i32, i32) {
    %c0_i32 = arith.constant 0 : i32
    %c0_i32_0 = arith.constant 0 : i32
    %c0_i32_1 = arith.constant 0 : i32
    return %c0_i32, %c0_i32_0 : i32, i32
  }
  func.func @transform_8(%arg0: i32) -> (i32, i32) {
    %c0_i32 = arith.constant 0 : i32
    %c0_i32_0 = arith.constant 0 : i32
    %c0_i32_1 = arith.constant 0 : i32
    return %c0_i32, %c0_i32_0 : i32, i32
  }
  func.func @transform_9(%arg0: i32) -> (i32, i32) {
    %c0_i32 = arith.constant 0 : i32
    %c0_i32_0 = arith.constant 0 : i32
    return %c0_i32, %arg0 : i32, i32
  }
}

</mosaic_0001>

<llo_original>
// kernel: tpu_custom_call.1
$region0: #{tpu_custom_call.1}
  #allocation0 [shape = 'u32[]', space=smem, size = 0x4, offset = 0x4, fixed_abs, tag = 'smem constant byte address 0x4 - core index']
  #allocation1 [shape = 'u32[144,128]{1,0:T(1,128)}', space=vmem, size = 0x12000, scoped, tag = 'internal scratch']
  #allocation2 [shape = 'f32[1,1]{1,0:T(1,128)S(1)}', space=vmem, size = 0x200, scoped, tag = 'scoped memory for tpu_custom_call.1']
  %s0 = inlined_call_operand.hbm [shape: f32[48,2048], index: 0, kind: input, shape index: {}]
  %s1 = inlined_call_operand.vmem [shape: f32[6,48], index: 1, kind: input, shape index: {}]
  %s2 = inlined_call_operand.vmem [shape: f32[5,1], index: 2, kind: input, shape index: {}]
  %s3 = inlined_call_operand.vmem [shape: f32[32,48], index: 3, kind: input, shape index: {}]
  %s4 = inlined_call_operand.vmem [shape: f32[32,1], index: 4, kind: input, shape index: {}]
  %s5 = inlined_call_operand.vmem [shape: f32[16,32], index: 5, kind: input, shape index: {}]
  %s6 = inlined_call_operand.vmem [shape: f32[16,1], index: 6, kind: input, shape index: {}]
  %s7 = inlined_call_operand.vmem [shape: f32[1,16], index: 7, kind: input, shape index: {}]
  %s8 = inlined_call_operand.<no memory space> [shape: f32[1,1], index: 8, kind: input, shape index: {}]
  %s9 = inlined_call_operand.hbm [shape: f32[1,2048], index: 9, kind: output, shape index: {}]
  %s10 = sld [smem:[#allocation0]]
  $region73: #{tpu_custom_call.1} parent=0
    _
  %s12 = ssub.s32 1, %s10
  %s13 = scalar_select 0, %s12, %s10
  %v14 = vstv %s8
  %15 = vst [vmem:[#allocation2] sm:$0x1] %v14
  $region1: #{tpu_custom_call.1} parent=0
    #allocation3 [shape = 'u8[98304]{0}', space=vmem, size = 0x18000, scoped, tag = 'input window, operand 0']
    #allocation4 [shape = 's32[2]{0}', space=sflag, size = 0x8, scoped, tag = 'scoped memory for tpu_custom_call.1']
    #allocation5 [shape = 's32[2]{0}', space=sflag, size = 0x8, scoped, tag = 'scoped memory for tpu_custom_call.1']
    #allocation6 [shape = 'u8[2048]{0}', space=vmem, size = 0x800, scoped, tag = 'output window, operand 0']
    %16 = vsyncpa [#allocation4], 0
    %s17 = scalar_lea.sflag [#allocation4], 1
    %18 = vsyncpa %s17, 0
    %19 = vsyncpa [#allocation5], 0
    %s20 = scalar_lea.sflag [#allocation5], 1
    %21 = vsyncpa %s20, 0
    loop: start=0, step=1, limit=10
    $region2: #{tpu_custom_call.1} parent=1 // loop_pre_header
      _
    $region3: #{tpu_custom_call.1} parent=1 // loop_header
      %s23 = sphi 0, %s27
      %p24 = scmp.ge.s32.totalorder %s23, 10
      %s33 = sphi 0, %s35
      %s36 = sphi 0, %s33
      %s37 = sphi 0, %s36
      %s53 = sphi 0, %s37
      %s57 = sphi 0, %s57
      %s59 = sphi 0, %s57
      %s60 = sphi 0, %s59
      %s74 = sphi 0, %s60
      %s78 = sphi 0, %s78
      %s80 = sphi 0, %s78
      %s81 = sphi 0, %s80
      %s95 = sphi 0, %s81
      %s99 = sphi 0, %s99
      %s101 = sphi 0, %s99
      %s102 = sphi 0, %s101
      %s116 = sphi 0, %s102
      %s120 = sphi 0, %s120
      %s122 = sphi 0, %s120
      %s123 = sphi 0, %s122
      %s137 = sphi 0, %s123
      %s141 = sphi 0, %s141
      %s143 = sphi 0, %s141
      %s144 = sphi 0, %s143
      %s158 = sphi 0, %s144
      %s162 = sphi 0, %s162
      %s164 = sphi 0, %s162
      %s165 = sphi 0, %s164
      %s179 = sphi 0, %s165
      %s183 = sphi 0, %s183
      %s185 = sphi 0, %s183
      %s186 = sphi 0, %s185
      %s200 = sphi 0, %s186
      %s204 = sphi 0, %s204
      %s206 = sphi 0, %s204
      %s207 = sphi 0, %s206
      %s221 = sphi 0, %s207
      %s227 = sphi 0, %s229
      %s230 = sphi 0, %s227
      %s231 = sphi 0, %s230
      %s247 = sphi 0, %s231
    $region4: #{tpu_custom_call.1} parent=1 // loop_header_branch
      %26 = sbr.rel (%p24) target = $region8
    $region5: #{tpu_custom_call.1} parent=1 // loop_body
      %s28 = ssub.s32 %s23, 1
      %s29 = ssub.s32 %s23, 2
      %s30 = sadd.s32 %s23, 1
      %s31 = ssub.s32 %s23, %s30
      %p32 = scmp.eq.s32.totalorder %s31, 0
      %s34 = sadd.s32 %s33, 1
      %s35 = scalar_select %p32, %s33, %s34
      %p38 = pneg %p32
      %p39 = scmp.eq.s32.totalorder %s23, 7
      %p40 = por %p38, %p39
      %p41 = scmp.ne.s32.totalorder %s33, %s36
      %p42 = scmp.eq.s32.totalorder %s23, 0
      %p43 = por %p41, %p42
      %p44 = scmp.ne.s32.totalorder %s33, %s36
      %p45 = scmp.eq.s32.totalorder %s28, 7
      %p46 = por %p44, %p45
      %p47 = scmp.ne.s32.totalorder %s36, %s37
      %p48 = scmp.eq.s32.totalorder %s28, 0
      %p49 = por %p47, %p48
      %p50 = scmp.ne.s32.totalorder %s36, %s37
      %p51 = scmp.eq.s32.totalorder %s29, 7
      %p52 = por %p50, %p51
      %p54 = scmp.ne.s32.totalorder %s37, %s53
      %p55 = scmp.eq.s32.totalorder %s29, 0
      %p56 = por %p54, %p55
      %s58 = sadd.s32 %s57, 1
      %p61 = scmp.eq.s32.totalorder %s23, 7
      %p62 = scmp.ne.s32.totalorder %s57, %s59
      %p63 = scmp.eq.s32.totalorder %s23, 0
      %p64 = por %p62, %p63
      %p65 = scmp.ne.s32.totalorder %s57, %s59
      %p66 = scmp.eq.s32.totalorder %s28, 7
      %p67 = por %p65, %p66
      %p68 = scmp.ne.s32.totalorder %s59, %s60
      %p69 = scmp.eq.s32.totalorder %s28, 0
      %p70 = por %p68, %p69
      %p71 = scmp.ne.s32.totalorder %s59, %s60
      %p72 = scmp.eq.s32.totalorder %s29, 7
      %p73 = por %p71, %p72
      %p75 = scmp.ne.s32.totalorder %s60, %s74
      %p76 = scmp.eq.s32.totalorder %s29, 0
      %p77 = por %p75, %p76
      %s79 = sadd.s32 %s78, 1
      %p82 = scmp.eq.s32.totalorder %s23, 7
      %p83 = scmp.ne.s32.totalorder %s78, %s80
      %p84 = scmp.eq.s32.totalorder %s23, 0
      %p85 = por %p83, %p84
      %p86 = scmp.ne.s32.totalorder %s78, %s80
      %p87 = scmp.eq.s32.totalorder %s28, 7
      %p88 = por %p86, %p87
      %p89 = scmp.ne.s32.totalorder %s80, %s81
      %p90 = scmp.eq.s32.totalorder %s28, 0
      %p91 = por %p89, %p90
      %p92 = scmp.ne.s32.totalorder %s80, %s81
      %p93 = scmp.eq.s32.totalorder %s29, 7
      %p94 = por %p92, %p93
      %p96 = scmp.ne.s32.totalorder %s81, %s95
      %p97 = scmp.eq.s32.totalorder %s29, 0
      %p98 = por %p96, %p97
      %s100 = sadd.s32 %s99, 1
      %p103 = scmp.eq.s32.totalorder %s23, 7
      %p104 = scmp.ne.s32.totalorder %s99, %s101
      %p105 = scmp.eq.s32.totalorder %s23, 0
      %p106 = por %p104, %p105
      %p107 = scmp.ne.s32.totalorder %s99, %s101
      %p108 = scmp.eq.s32.totalorder %s28, 7
      %p109 = por %p107, %p108
      %p110 = scmp.ne.s32.totalorder %s101, %s102
      %p111 = scmp.eq.s32.totalorder %s28, 0
      %p112 = por %p110, %p111
      %p113 = scmp.ne.s32.totalorder %s101, %s102
      %p114 = scmp.eq.s32.totalorder %s29, 7
      %p115 = por %p113, %p114
      %p117 = scmp.ne.s32.totalorder %s102, %s116
      %p118 = scmp.eq.s32.totalorder %s29, 0
      %p119 = por %p117, %p118
      %s121 = sadd.s32 %s120, 1
      %p124 = scmp.eq.s32.totalorder %s23, 7
      %p125 = scmp.ne.s32.totalorder %s120, %s122
      %p126 = scmp.eq.s32.totalorder %s23, 0
      %p127 = por %p125, %p126
      %p128 = scmp.ne.s32.totalorder %s120, %s122
      %p129 = scmp.eq.s32.totalorder %s28, 7
      %p130 = por %p128, %p129
      %p131 = scmp.ne.s32.totalorder %s122, %s123
      %p132 = scmp.eq.s32.totalorder %s28, 0
      %p133 = por %p131, %p132
      %p134 = scmp.ne.s32.totalorder %s122, %s123
      %p135 = scmp.eq.s32.totalorder %s29, 7
      %p136 = por %p134, %p135
      %p138 = scmp.ne.s32.totalorder %s123, %s137
      %p139 = scmp.eq.s32.totalorder %s29, 0
      %p140 = por %p138, %p139
      %s142 = sadd.s32 %s141, 1
      %p145 = scmp.eq.s32.totalorder %s23, 7
      %p146 = scmp.ne.s32.totalorder %s141, %s143
      %p147 = scmp.eq.s32.totalorder %s23, 0
      %p148 = por %p146, %p147
      %p149 = scmp.ne.s32.totalorder %s141, %s143
      %p150 = scmp.eq.s32.totalorder %s28, 7
      %p151 = por %p149, %p150
      %p152 = scmp.ne.s32.totalorder %s143, %s144
      %p153 = scmp.eq.s32.totalorder %s28, 0
      %p154 = por %p152, %p153
      %p155 = scmp.ne.s32.totalorder %s143, %s144
      %p156 = scmp.eq.s32.totalorder %s29, 7
      %p157 = por %p155, %p156
      %p159 = scmp.ne.s32.totalorder %s144, %s158
      %p160 = scmp.eq.s32.totalorder %s29, 0
      %p161 = por %p159, %p160
      %s163 = sadd.s32 %s162, 1
      %p166 = scmp.eq.s32.totalorder %s23, 7
      %p167 = scmp.ne.s32.totalorder %s162, %s164
      %p168 = scmp.eq.s32.totalorder %s23, 0
      %p169 = por %p167, %p168
      %p170 = scmp.ne.s32.totalorder %s162, %s164
      %p171 = scmp.eq.s32.totalorder %s28, 7
      %p172 = por %p170, %p171
      %p173 = scmp.ne.s32.totalorder %s164, %s165
      %p174 = scmp.eq.s32.totalorder %s28, 0
      %p175 = por %p173, %p174
      %p176 = scmp.ne.s32.totalorder %s164, %s165
      %p177 = scmp.eq.s32.totalorder %s29, 7
      %p178 = por %p176, %p177
      %p180 = scmp.ne.s32.totalorder %s165, %s179
      %p181 = scmp.eq.s32.totalorder %s29, 0
      %p182 = por %p180, %p181
      %s184 = sadd.s32 %s183, 1
      %p187 = scmp.eq.s32.totalorder %s23, 7
      %p188 = scmp.ne.s32.totalorder %s183, %s185
      %p189 = scmp.eq.s32.totalorder %s23, 0
      %p190 = por %p188, %p189
      %p191 = scmp.ne.s32.totalorder %s183, %s185
      %p192 = scmp.eq.s32.totalorder %s28, 7
      %p193 = por %p191, %p192
      %p194 = scmp.ne.s32.totalorder %s185, %s186
      %p195 = scmp.eq.s32.totalorder %s28, 0
      %p196 = por %p194, %p195
      %p197 = scmp.ne.s32.totalorder %s185, %s186
      %p198 = scmp.eq.s32.totalorder %s29, 7
      %p199 = por %p197, %p198
      %p201 = scmp.ne.s32.totalorder %s186, %s200
      %p202 = scmp.eq.s32.totalorder %s29, 0
      %p203 = por %p201, %p202
      %s205 = sadd.s32 %s204, 1
      %p208 = scmp.eq.s32.totalorder %s23, 7
      %p209 = scmp.ne.s32.totalorder %s204, %s206
      %p210 = scmp.eq.s32.totalorder %s23, 0
      %p211 = por %p209, %p210
      %p212 = scmp.ne.s32.totalorder %s204, %s206
      %p213 = scmp.eq.s32.totalorder %s28, 7
      %p214 = por %p212, %p213
      %p215 = scmp.ne.s32.totalorder %s206, %s207
      %p216 = scmp.eq.s32.totalorder %s28, 0
      %p217 = por %p215, %p216
      %p218 = scmp.ne.s32.totalorder %s206, %s207
      %p219 = scmp.eq.s32.totalorder %s29, 7
      %p220 = por %p218, %p219
      %p222 = scmp.ne.s32.totalorder %s207, %s221
      %p223 = scmp.eq.s32.totalorder %s29, 0
      %p224 = por %p222, %p223
      %s225 = ssub.s32 %s23, %s30
      %p226 = scmp.eq.s32.totalorder %s225, 0
      %s228 = sadd.s32 %s227, 1
      %s229 = scalar_select %p226, %s227, %s228
      %p232 = pneg %p226
      %p233 = scmp.eq.s32.totalorder %s23, 7
      %p234 = por %p232, %p233
      %p235 = scmp.ne.s32.totalorder %s227, %s230
      %p236 = scmp.eq.s32.totalorder %s23, 0
      %p237 = por %p235, %p236
      %p238 = scmp.ne.s32.totalorder %s227, %s230
      %p239 = scmp.eq.s32.totalorder %s28, 7
      %p240 = por %p238, %p239
      %p241 = scmp.ne.s32.totalorder %s230, %s231
      %p242 = scmp.eq.s32.totalorder %s28, 0
      %p243 = por %p241, %p242
      %p244 = scmp.ne.s32.totalorder %s230, %s231
      %p245 = scmp.eq.s32.totalorder %s29, 7
      %p246 = por %p244, %p245
      %p248 = scmp.ne.s32.totalorder %s231, %s247
      %p249 = scmp.eq.s32.totalorder %s29, 0
      %p250 = por %p248, %p249
      %p251 = scmp.le.s32.totalorder 1, %s23
      %p252 = scmp.lt.s32.totalorder %s23, 9
      %p253 = pnand %p251, %p252
      %p254 = pneg %p253
      // Predicated region
      $region9: #{tpu_custom_call.1} parent=5 // pred_check
        _
      $region10: #{tpu_custom_call.1} parent=5 // pred_check_branch
        %256 = sbr.rel (%p253) target = $region12
      $region11: #{tpu_custom_call.1} parent=5 // pred_region
        %s257 = ssub.s32 %s23, 1
        // Predicated region
        $region13: #{tpu_custom_call.1} parent=11 // pred_check
          %p258 = pneg %p70
        $region14: #{tpu_custom_call.1} parent=11 // pred_check_branch
          %260 = sbr.rel (%p258) target = $region16
        $region15: #{tpu_custom_call.1} parent=11 // pred_region
          _
        $region16: #{tpu_custom_call.1} parent=11 // pred_fallthru
          _
        // Predicated region
        $region17: #{tpu_custom_call.1} parent=11 // pred_check
          %p261 = pneg %p91
        $region18: #{tpu_custom_call.1} parent=11 // pred_check_branch
          %263 = sbr.rel (%p261) target = $region20
        $region19: #{tpu_custom_call.1} parent=11 // pred_region
          _
        $region20: #{tpu_custom_call.1} parent=11 // pred_fallthru
          _
        // Predicated region
        $region21: #{tpu_custom_call.1} parent=11 // pred_check
          %p264 = pneg %p112
        $region22: #{tpu_custom_call.1} parent=11 // pred_check_branch
          %266 = sbr.rel (%p264) target = $region24
        $region23: #{tpu_custom_call.1} parent=11 // pred_region
          _
        $region24: #{tpu_custom_call.1} parent=11 // pred_fallthru
          _
        // Predicated region
        $region25: #{tpu_custom_call.1} parent=11 // pred_check
          %p267 = pneg %p133
        $region26: #{tpu_custom_call.1} parent=11 // pred_check_branch
          %269 = sbr.rel (%p267) target = $region28
        $region27: #{tpu_custom_call.1} parent=11 // pred_region
          _
        $region28: #{tpu_custom_call.1} parent=11 // pred_fallthru
          _
        // Predicated region
        $region29: #{tpu_custom_call.1} parent=11 // pred_check
          %p270 = pneg %p154
        $region30: #{tpu_custom_call.1} parent=11 // pred_check_branch
          %272 = sbr.rel (%p270) target = $region32
        $region31: #{tpu_custom_call.1} parent=11 // pred_region
          _
        $region32: #{tpu_custom_call.1} parent=11 // pred_fallthru
          _
        // Predicated region
        $region33: #{tpu_custom_call.1} parent=11 // pred_check
          %p273 = pneg %p175
        $region34: #{tpu_custom_call.1} parent=11 // pred_check_branch
          %275 = sbr.rel (%p273) target = $region36
        $region35: #{tpu_custom_call.1} parent=11 // pred_region
          _
        $region36: #{tpu_custom_call.1} parent=11 // pred_fallthru
          _
        // Predicated region
        $region37: #{tpu_custom_call.1} parent=11 // pred_check
          %p276 = pneg %p196
        $region38: #{tpu_custom_call.1} parent=11 // pred_check_branch
          %278 = sbr.rel (%p276) target = $region40
        $region39: #{tpu_custom_call.1} parent=11 // pred_region
          _
        $region40: #{tpu_custom_call.1} parent=11 // pred_fallthru
          _
        // Predicated region
        $region41: #{tpu_custom_call.1} parent=11 // pred_check
          %p279 = pneg %p217
        $region42: #{tpu_custom_call.1} parent=11 // pred_check_branch
          %281 = sbr.rel (%p279) target = $region44
        $region43: #{tpu_custom_call.1} parent=11 // pred_region
          _
        $region44: #{tpu_custom_call.1} parent=11 // pred_fallthru
          _
      $region12: #{tpu_custom_call.1} parent=5 // pred_fallthru
        _
      %p282 = scmp.lt.s32.totalorder %s23, 8
      // Predicated region
      $region45: #{tpu_custom_call.1} parent=5 // pred_check
        %p283 = pneg %p282
      $region46: #{tpu_custom_call.1} parent=5 // pred_check_branch
        %285 = sbr.rel (%p283) target = $region48
      $region47: #{tpu_custom_call.1} parent=5 // pred_region
        // Predicated region
        $region49: #{tpu_custom_call.1} parent=47 // pred_check
          %p286 = pneg %p43
        $region50: #{tpu_custom_call.1} parent=47 // pred_check_branch
          %288 = sbr.rel (%p286) target = $region52
        $region51: #{tpu_custom_call.1} parent=47 // pred_region
          %s289 = sand.u32 %s33, 1
          %s290 = scalar_lea.sflag [#allocation4], %s289
          %s291 = sand.u32 %s33, 1
          %s292 = smul.addr %s291, 96
          %s293 = scalar_lea.vmem [#allocation3], %s292
          %s294 = smul.u32 2, %s23
          %s296 = ssub.s32 1536, 1536
          %297 = vsyncadd %s290, %s296
          %s298 = smul.addr %s294, 128
          %s299 = scalar_lea.hbm %s0, %s298
          %s300 = sshll.u32 %s293, 4
          %s301 = int_to_ptr.vmem [resolvable:$true] %s300
          %306 = dma.hbm_to_vmem [thread:$0]  %s299, 1536, %s301, %s290, 2048, 256, 16
        $region52: #{tpu_custom_call.1} parent=47 // pred_fallthru
          _
      $region48: #{tpu_custom_call.1} parent=5 // pred_fallthru
        _
      %p307 = scmp.le.s32.totalorder 1, %s23
      %p308 = scmp.lt.s32.totalorder %s23, 9
      %p309 = pnand %p307, %p308
      %p310 = pneg %p309
      // Predicated region
      $region53: #{tpu_custom_call.1} parent=5 // pred_check
        _
      $region54: #{tpu_custom_call.1} parent=5 // pred_check_branch
        %312 = sbr.rel (%p309) target = $region56
      $region55: #{tpu_custom_call.1} parent=5 // pred_region
        %s313 = ssub.s32 %s23, 1
        %s314 = sand.u32 %s36, 1
        %s315 = scalar_lea.sflag [#allocation4], %s314
        %s316 = sand.u32 %s36, 1
        %s317 = smul.addr %s316, 96
        %s318 = scalar_lea.vmem [#allocation3], %s317
        // Predicated region
        $region57: #{tpu_custom_call.1} parent=55 // pred_check
          %p319 = pneg %p49
        $region58: #{tpu_custom_call.1} parent=55 // pred_check_branch
          %321 = sbr.rel (%p319) target = $region60
        $region59: #{tpu_custom_call.1} parent=55 // pred_region
          %322 = dma.done %s315, 1536
        $region60: #{tpu_custom_call.1} parent=55 // pred_fallthru
          _
        %s323 = sand.u32 %s36, 1
        %s324 = scalar_lea.sflag [#allocation4], %s323
        %s325 = sand.u32 %s36, 1
        %s326 = smul.addr %s325, 96
        %s327 = scalar_lea.vmem [#allocation3], %s326
        %p328 = pneg %p49
        %p329 = pneg %p46
        %p330 = pneg %p70
        %p331 = pneg %p67
        %p332 = pneg %p91
        %p333 = pneg %p88
        %p334 = pneg %p112
        %p335 = pneg %p109
        %p336 = pneg %p133
        %p337 = pneg %p130
        %p338 = pneg %p154
        %p339 = pneg %p151
        %p340 = pneg %p175
        %p341 = pneg %p172
        %p342 = pneg %p196
        %p343 = pneg %p193
        %p344 = pneg %p217
        %p345 = pneg %p214
        %p346 = pneg %p243
        %p347 = pneg %p240
        %s348 = sand.u32 %s230, 1
        %s349 = scalar_lea.sflag [#allocation5], %s348
        %s350 = sand.u32 %s230, 1
        %s351 = smul.addr %s350, 2
        %s352 = scalar_lea.vmem [#allocation6], %s351
        %s353 = smul.u32 2, %s28
        %s354 = smul.u32 2, %s28
        %v355 = vld [vmem:[%s318] sm:$0xff]
        %v356 = vld [vmem:[%s318 + $0x8] sm:$0xff]
        %v357 = vld [vmem:[%s318 + $0x10] sm:$0xff]
        %v358 = vld [vmem:[%s318 + $0x18] sm:$0xff]
        %v359 = vld [vmem:[%s318 + $0x20] sm:$0xff]
        %v360 = vld [vmem:[%s318 + $0x28] sm:$0xff]
        %v361 = vld [vmem:[%s318 + $0x30] sm:$0xff]
        %v362 = vld [vmem:[%s318 + $0x38] sm:$0xff]
        %v363 = vld [vmem:[%s318 + $0x40] sm:$0xff]
        %v364 = vld [vmem:[%s318 + $0x48] sm:$0xff]
        %v365 = vld [vmem:[%s318 + $0x50] sm:$0xff]
        %v366 = vld [vmem:[%s318 + $0x58] sm:$0xff]
        %v367 = vld [vmem:[%s1] sm:$0x3f]
        %vm368 = vcmask 392192
        %v370 = vsel %vm368, %v367, 0
        %372 = vmatprep.subr.mxu0 %v356
        %373 = vmatpush1.msra.mxu0 %v355
        %374 = vmatprep.subr.mxu0 %v358
        %375 = vmatpush1.msra.mxu0 %v357
        %376 = vmatprep.subr.mxu0 %v360
        %377 = vmatpush1.msra.mxu0 %v359
        %378 = vmatprep.subr.mxu0 %v362
        %379 = vmatpush1.msra.mxu0 %v361
        %380 = vmatprep.subr.mxu0 %v364
        %381 = vmatpush1.msra.mxu0 %v363
        %382 = vmatprep.subr.mxu0 %v366
        %383 = vmatpush1.msra.mxu0 %v365
        %384 = vmatprep.subr.mxu0 0.0
        %385 = vmatpush1.msra.mxu0 0.0
        %386 = vmatprep.subr.mxu0 0.0
        %387 = vmatpush1.msra.mxu0 0.0
        %388 = vmatprep.subr.mxu0 0.0
        %389 = vmatpush1.msra.mxu0 0.0
        %390 = vmatprep.subr.mxu0 0.0
        %391 = vmatpush1.msra.mxu0 0.0
        %392 = vmatprep.subr.mxu0 0.0
        %393 = vmatpush1.msra.mxu0 0.0
        %394 = vmatprep.subr.mxu0 0.0
        %395 = vmatpush1.msra.mxu0 0.0
        %396 = vmatprep.subr.mxu0 0.0
        %397 = vmatpush1.msra.mxu0 0.0
        %398 = vmatprep.subr.mxu0 0.0
        %399 = vmatpush1.msra.mxu0 0.0
        %400 = vmatprep.subr.mxu0 0.0
        %401 = vmatpush1.msra.mxu0 0.0
        %402 = vmatprep.subr.mxu0 0.0
        %403 = vmatpush1.msra.mxu0 0.0
        %404 = vmatprep.subr.mxu0 0.0
        %405 = vmatpush1.msra.mxu0 0.0
        %406 = vmatprep.subr.mxu0 0.0
        %407 = vmatpush1.msra.mxu0 0.0
        %408 = vmatprep.subr.mxu0 0.0
        %409 = vmatpush1.msra.mxu0 0.0
        %410 = vmatprep.subr.mxu0 0.0
        %411 = vmatpush1.msra.mxu0 0.0
        %412 = vmatprep.subr.mxu0 0.0
        %413 = vmatpush1.msra.mxu0 0.0
        %414 = vmatprep.subr.mxu0 0.0
        %415 = vmatpush1.msra.mxu0 0.0
        %416 = vmatprep.subr.mxu0 0.0
        %417 = vmatpush1.msra.mxu0 0.0
        %418 = vmatprep.subr.mxu0 0.0
        %419 = vmatpush1.msra.mxu0 0.0
        %420 = vmatprep.subr.mxu0 0.0
        %421 = vmatpush1.msra.mxu0 0.0
        %422 = vmatprep.subr.mxu0 0.0
        %423 = vmatpush1.msra.mxu0 0.0
        %424 = vmatprep.subr.mxu0 0.0
        %425 = vmatpush1.msra.mxu0 0.0
        %426 = vmatprep.subr.mxu0 0.0
        %427 = vmatpush1.msra.mxu0 0.0
        %428 = vmatprep.subr.mxu0 0.0
        %429 = vmatpush1.msra.mxu0 0.0
        %430 = vmatprep.subr.mxu0 0.0
        %431 = vmatpush1.msra.mxu0 0.0
        %432 = vmatprep.subr.mxu0 0.0
        %433 = vmatpush1.msra.mxu0 0.0
        %434 = vmatprep.subr.mxu0 0.0
        %435 = vmatpush1.msra.mxu0 0.0
        %436 = vmatprep.mubr.f32.mxu0 0.0
        %437 = vmatmul.mubr.f32.gmra.mrb[0].mxu0 %v370
        %v438 = vpop.f32.mrb[0].mxu0
        %v439 = vadd.f32 0.0, %v438
        %v440 = vpop.f32.mrb[0].mxu0
        %v441 = vadd.f32 0.0, %v440
        %442 = vdwg.mxu0
        %v443 = vadd.f32 %v439, 1.0
        %v444 = vadd.f32 %v441, 1.0
        %v445 = vld [vmem:[%s2] sm:$0x1]
        %447 = vset.pattern.permute.xlu0 0
        %448 = vperm.xlu0 %447, %v445
        %v449 = vpop.permute.xlu0 %448
        %v451 = vadd.f32 %v443, %v449
        %v452 = vadd.f32 %v444, %v449
        %v455 = vrot.slane %v443, 1
        %v456 = vrot.slane %v444, 1
        %v459 = vmul.f32 %v451, %v455
        %v460 = vmul.f32 %v452, %v456
        %v461 = vld [vmem:[%s2 + $0x1] sm:$0x1]
        %463 = vset.pattern.permute.xlu0 0
        %464 = vperm.xlu0 %463, %v461
        %v465 = vpop.permute.xlu0 %464
        %v467 = vadd.f32 %v459, %v465
        %v468 = vadd.f32 %v460, %v465
        %v469 = vrot.slane %v443, 2
        %v470 = vrot.slane %v444, 2
        %v473 = vmul.f32 %v467, %v469
        %v474 = vmul.f32 %v468, %v470
        %v475 = vld [vmem:[%s2 + $0x2] sm:$0x1]
        %477 = vset.pattern.permute.xlu0 0
        %478 = vperm.xlu0 %477, %v475
        %v479 = vpop.permute.xlu0 %478
        %v481 = vadd.f32 %v473, %v479
        %v482 = vadd.f32 %v474, %v479
        %v483 = vrot.slane %v443, 3
        %v484 = vrot.slane %v444, 3
        %v487 = vmul.f32 %v481, %v483
        %v488 = vmul.f32 %v482, %v484
        %v489 = vld [vmem:[%s2 + $0x3] sm:$0x1]
        %491 = vset.pattern.permute.xlu0 0
        %492 = vperm.xlu0 %491, %v489
        %v493 = vpop.permute.xlu0 %492
        %v495 = vadd.f32 %v487, %v493
        %v496 = vadd.f32 %v488, %v493
        %v497 = vrot.slane %v443, 4
        %v498 = vrot.slane %v444, 4
        %v501 = vmul.f32 %v495, %v497
        %v502 = vmul.f32 %v496, %v498
        %v503 = vld [vmem:[%s2 + $0x4] sm:$0x1]
        %505 = vset.pattern.permute.xlu0 0
        %506 = vperm.xlu0 %505, %v503
        %v507 = vpop.permute.xlu0 %506
        %v509 = vadd.f32 %v501, %v507
        %v510 = vadd.f32 %v502, %v507
        %v513 = vrot.slane %v439, 5
        %v514 = vrot.slane %v441, 5
        %v517 = vmul.f32 %v509, %v513
        %v518 = vmul.f32 %v510, %v514
        %v519 = vld [vmem:[%s3] sm:$0xff]
        %v520 = vld [vmem:[%s3 + $0x8] sm:$0xff]
        %v521 = vld [vmem:[%s3 + $0x10] sm:$0xff]
        %v522 = vld [vmem:[%s3 + $0x18] sm:$0xff]
        %v523 = vld [vmem:[%s4] sm:$0xff]
        %v524 = vld [vmem:[%s4 + $0x8] sm:$0xff]
        %v525 = vld [vmem:[%s4 + $0x10] sm:$0xff]
        %v526 = vld [vmem:[%s4 + $0x18] sm:$0xff]
        %528 = vset.pattern.permute.xlu0 0
        %529 = vperm.xlu0 %528, %v523
        %v530 = vpop.permute.xlu0 %529
        %533 = vset.pattern.permute.xlu0 0
        %534 = vperm.xlu0 %533, %v524
        %v535 = vpop.permute.xlu0 %534
        %538 = vset.pattern.permute.xlu0 0
        %539 = vperm.xlu0 %538, %v525
        %v540 = vpop.permute.xlu0 %539
        %543 = vset.pattern.permute.xlu0 0
        %544 = vperm.xlu0 %543, %v526
        %v545 = vpop.permute.xlu0 %544
        %v548 = vsel %vm368, %v519, 0
        %v551 = vsel %vm368, %v520, 0
        %v554 = vsel %vm368, %v521, 0
        %v557 = vsel %vm368, %v522, 0
        %559 = vmatprep.subr.mxu0 %v356
        %560 = vmatpush1.msra.mxu0 %v355
        %561 = vmatprep.subr.mxu0 %v358
        %562 = vmatpush1.msra.mxu0 %v357
        %563 = vmatprep.subr.mxu0 %v360
        %564 = vmatpush1.msra.mxu0 %v359
        %565 = vmatprep.subr.mxu0 %v362
        %566 = vmatpush1.msra.mxu0 %v361
        %567 = vmatprep.subr.mxu0 %v364
        %568 = vmatpush1.msra.mxu0 %v363
        %569 = vmatprep.subr.mxu0 %v366
        %570 = vmatpush1.msra.mxu0 %v365
        %571 = vmatprep.subr.mxu0 0.0
        %572 = vmatpush1.msra.mxu0 0.0
        %573 = vmatprep.subr.mxu0 0.0
        %574 = vmatpush1.msra.mxu0 0.0
        %575 = vmatprep.subr.mxu0 0.0
        %576 = vmatpush1.msra.mxu0 0.0
        %577 = vmatprep.subr.mxu0 0.0
        %578 = vmatpush1.msra.mxu0 0.0
        %579 = vmatprep.subr.mxu0 0.0
        %580 = vmatpush1.msra.mxu0 0.0
        %581 = vmatprep.subr.mxu0 0.0
        %582 = vmatpush1.msra.mxu0 0.0
        %583 = vmatprep.subr.mxu0 0.0
        %584 = vmatpush1.msra.mxu0 0.0
        %585 = vmatprep.subr.mxu0 0.0
        %586 = vmatpush1.msra.mxu0 0.0
        %587 = vmatprep.subr.mxu0 0.0
        %588 = vmatpush1.msra.mxu0 0.0
        %589 = vmatprep.subr.mxu0 0.0
        %590 = vmatpush1.msra.mxu0 0.0
        %591 = vmatprep.subr.mxu0 0.0
        %592 = vmatpush1.msra.mxu0 0.0
        %593 = vmatprep.subr.mxu0 0.0
        %594 = vmatpush1.msra.mxu0 0.0
        %595 = vmatprep.subr.mxu0 0.0
        %596 = vmatpush1.msra.mxu0 0.0
        %597 = vmatprep.subr.mxu0 0.0
        %598 = vmatpush1.msra.mxu0 0.0
        %599 = vmatprep.subr.mxu0 0.0
        %600 = vmatpush1.msra.mxu0 0.0
        %601 = vmatprep.subr.mxu0 0.0
        %602 = vmatpush1.msra.mxu0 0.0
        %603 = vmatprep.subr.mxu0 0.0
        %604 = vmatpush1.msra.mxu0 0.0
        %605 = vmatprep.subr.mxu0 0.0
        %606 = vmatpush1.msra.mxu0 0.0
        %607 = vmatprep.subr.mxu0 0.0
        %608 = vmatpush1.msra.mxu0 0.0
        %609 = vmatprep.subr.mxu0 0.0
        %610 = vmatpush1.msra.mxu0 0.0
        %611 = vmatprep.subr.mxu0 0.0
        %612 = vmatpush1.msra.mxu0 0.0
        %613 = vmatprep.subr.mxu0 0.0
        %614 = vmatpush1.msra.mxu0 0.0
        %615 = vmatprep.subr.mxu0 0.0
        %616 = vmatpush1.msra.mxu0 0.0
        %617 = vmatprep.subr.mxu0 0.0
        %618 = vmatpush1.msra.mxu0 0.0
        %619 = vmatprep.subr.mxu0 0.0
        %620 = vmatpush1.msra.mxu0 0.0
        %621 = vmatprep.subr.mxu0 0.0
        %622 = vmatpush1.msra.mxu0 0.0
        %623 = vmatprep.mubr.f32.mxu0 0.0
        %624 = vmatmul.mubr.f32.gmra.mrb[0].mxu0 %v548
        %v625 = vpop.f32.mrb[0].mxu0
        %v626 = vadd.f32 %v530, %v625
        %v627 = vpop.f32.mrb[0].mxu0
        %v628 = vadd.f32 %v530, %v627
        %629 = vmatprep.mubr.f32.mxu0 0.0
        %630 = vmatmul.mubr.f32.gmra.mrb[0].mxu0 %v551
        %v631 = vpop.f32.mrb[0].mxu0
        %v632 = vadd.f32 %v535, %v631
        %v633 = vpop.f32.mrb[0].mxu0
        %v634 = vadd.f32 %v535, %v633
        %635 = vmatprep.mubr.f32.mxu0 0.0
        %636 = vmatmul.mubr.f32.gmra.mrb[0].mxu0 %v554
        %v637 = vpop.f32.mrb[0].mxu0
        %v638 = vadd.f32 %v540, %v637
        %v639 = vpop.f32.mrb[0].mxu0
        %v640 = vadd.f32 %v540, %v639
        %641 = vmatprep.mubr.f32.mxu0 0.0
        %642 = vmatmul.mubr.f32.gmra.mrb[0].mxu0 %v557
        %v643 = vpop.f32.mrb[0].mxu0
        %v644 = vadd.f32 %v545, %v643
        %v645 = vpop.f32.mrb[0].mxu0
        %v646 = vadd.f32 %v545, %v645
        %647 = vdwg.mxu0
        %v648 = vmax.f32 %v626, 0.0
        %v649 = vmax.f32 %v628, 0.0
        %v650 = vmax.f32 %v632, 0.0
        %v651 = vmax.f32 %v634, 0.0
        %v652 = vmax.f32 %v638, 0.0
        %v653 = vmax.f32 %v640, 0.0
        %v654 = vmax.f32 %v644, 0.0
        %v655 = vmax.f32 %v646, 0.0
        %v656 = vld [vmem:[%s5] sm:$0xff]
        %v657 = vld [vmem:[%s5 + $0x8] sm:$0xff]
        %v658 = vld [vmem:[%s6] sm:$0xff]
        %v659 = vld [vmem:[%s6 + $0x8] sm:$0xff]
        %661 = vset.pattern.permute.xlu0 0
        %662 = vperm.xlu0 %661, %v658
        %v663 = vpop.permute.xlu0 %662
        %666 = vset.pattern.permute.xlu0 0
        %667 = vperm.xlu0 %666, %v659
        %v668 = vpop.permute.xlu0 %667
        %vm670 = vcmask 261120
        %v672 = vsel %vm670, %v656, 0
        %v675 = vsel %vm670, %v657, 0
        %677 = vmatprep.subr.mxu0 %v649
        %678 = vmatpush1.msra.mxu0 %v648
        %679 = vmatprep.subr.mxu0 %v651
        %680 = vmatpush1.msra.mxu0 %v650
        %681 = vmatprep.subr.mxu0 %v653
        %682 = vmatpush1.msra.mxu0 %v652
        %683 = vmatprep.subr.mxu0 %v655
        %684 = vmatpush1.msra.mxu0 %v654
        %685 = vmatprep.subr.mxu0 0.0
        %686 = vmatpush1.msra.mxu0 0.0
        %687 = vmatprep.subr.mxu0 0.0
        %688 = vmatpush1.msra.mxu0 0.0
        %689 = vmatprep.subr.mxu0 0.0
        %690 = vmatpush1.msra.mxu0 0.0
        %691 = vmatprep.subr.mxu0 0.0
        %692 = vmatpush1.msra.mxu0 0.0
        %693 = vmatprep.subr.mxu0 0.0
        %694 = vmatpush1.msra.mxu0 0.0
        %695 = vmatprep.subr.mxu0 0.0
        %696 = vmatpush1.msra.mxu0 0.0
        %697 = vmatprep.subr.mxu0 0.0
        %698 = vmatpush1.msra.mxu0 0.0
        %699 = vmatprep.subr.mxu0 0.0
        %700 = vmatpush1.msra.mxu0 0.0
        %701 = vmatprep.subr.mxu0 0.0
        %702 = vmatpush1.msra.mxu0 0.0
        %703 = vmatprep.subr.mxu0 0.0
        %704 = vmatpush1.msra.mxu0 0.0
        %705 = vmatprep.subr.mxu0 0.0
        %706 = vmatpush1.msra.mxu0 0.0
        %707 = vmatprep.subr.mxu0 0.0
        %708 = vmatpush1.msra.mxu0 0.0
        %709 = vmatprep.subr.mxu0 0.0
        %710 = vmatpush1.msra.mxu0 0.0
        %711 = vmatprep.subr.mxu0 0.0
        %712 = vmatpush1.msra.mxu0 0.0
        %713 = vmatprep.subr.mxu0 0.0
        %714 = vmatpush1.msra.mxu0 0.0
        %715 = vmatprep.subr.mxu0 0.0
        %716 = vmatpush1.msra.mxu0 0.0
        %717 = vmatprep.subr.mxu0 0.0
        %718 = vmatpush1.msra.mxu0 0.0
        %719 = vmatprep.subr.mxu0 0.0
        %720 = vmatpush1.msra.mxu0 0.0
        %721 = vmatprep.subr.mxu0 0.0
        %722 = vmatpush1.msra.mxu0 0.0
        %723 = vmatprep.subr.mxu0 0.0
        %724 = vmatpush1.msra.mxu0 0.0
        %725 = vmatprep.subr.mxu0 0.0
        %726 = vmatpush1.msra.mxu0 0.0
        %727 = vmatprep.subr.mxu0 0.0
        %728 = vmatpush1.msra.mxu0 0.0
        %729 = vmatprep.subr.mxu0 0.0
        %730 = vmatpush1.msra.mxu0 0.0
        %731 = vmatprep.subr.mxu0 0.0
        %732 = vmatpush1.msra.mxu0 0.0
        %733 = vmatprep.subr.mxu0 0.0
        %734 = vmatpush1.msra.mxu0 0.0
        %735 = vmatprep.subr.mxu0 0.0
        %736 = vmatpush1.msra.mxu0 0.0
        %737 = vmatprep.subr.mxu0 0.0
        %738 = vmatpush1.msra.mxu0 0.0
        %739 = vmatprep.subr.mxu0 0.0
        %740 = vmatpush1.msra.mxu0 0.0
        %741 = vmatprep.mubr.f32.mxu0 0.0
        %742 = vmatmul.mubr.f32.gmra.mrb[0].mxu0 %v672
        %v743 = vpop.f32.mrb[0].mxu0
        %v744 = vadd.f32 %v663, %v743
        %v745 = vpop.f32.mrb[0].mxu0
        %v746 = vadd.f32 %v663, %v745
        %747 = vmatprep.mubr.f32.mxu0 0.0
        %748 = vmatmul.mubr.f32.gmra.mrb[0].mxu0 %v675
        %v749 = vpop.f32.mrb[0].mxu0
        %v750 = vadd.f32 %v668, %v749
        %v751 = vpop.f32.mrb[0].mxu0
        %v752 = vadd.f32 %v668, %v751
        %753 = vdwg.mxu0
        %v754 = vmax.f32 %v744, 0.0
        %v755 = vmax.f32 %v746, 0.0
        %v756 = vmax.f32 %v750, 0.0
        %v757 = vmax.f32 %v752, 0.0
        %v758 = vld [vmem:[%s7] sm:$0x1]
        %vm759 = vcmask 130048
        %v761 = vsel %vm759, %v758, 0
        %763 = vmatprep.subr.mxu0 %v755
        %764 = vmatpush1.msra.mxu0 %v754
        %765 = vmatprep.subr.mxu0 %v757
        %766 = vmatpush1.msra.mxu0 %v756
        %767 = vmatprep.subr.mxu0 0.0
        %768 = vmatpush1.msra.mxu0 0.0
        %769 = vmatprep.subr.mxu0 0.0
        %770 = vmatpush1.msra.mxu0 0.0
        %771 = vmatprep.subr.mxu0 0.0
        %772 = vmatpush1.msra.mxu0 0.0
        %773 = vmatprep.subr.mxu0 0.0
        %774 = vmatpush1.msra.mxu0 0.0
        %775 = vmatprep.subr.mxu0 0.0
        %776 = vmatpush1.msra.mxu0 0.0
        %777 = vmatprep.subr.mxu0 0.0
        %778 = vmatpush1.msra.mxu0 0.0
        %779 = vmatprep.subr.mxu0 0.0
        %780 = vmatpush1.msra.mxu0 0.0
        %781 = vmatprep.subr.mxu0 0.0
        %782 = vmatpush1.msra.mxu0 0.0
        %783 = vmatprep.subr.mxu0 0.0
        %784 = vmatpush1.msra.mxu0 0.0
        %785 = vmatprep.subr.mxu0 0.0
        %786 = vmatpush1.msra.mxu0 0.0
        %787 = vmatprep.subr.mxu0 0.0
        %788 = vmatpush1.msra.mxu0 0.0
        %789 = vmatprep.subr.mxu0 0.0
        %790 = vmatpush1.msra.mxu0 0.0
        %791 = vmatprep.subr.mxu0 0.0
        %792 = vmatpush1.msra.mxu0 0.0
        %793 = vmatprep.subr.mxu0 0.0
        %794 = vmatpush1.msra.mxu0 0.0
        %795 = vmatprep.subr.mxu0 0.0
        %796 = vmatpush1.msra.mxu0 0.0
        %797 = vmatprep.subr.mxu0 0.0
        %798 = vmatpush1.msra.mxu0 0.0
        %799 = vmatprep.subr.mxu0 0.0
        %800 = vmatpush1.msra.mxu0 0.0
        %801 = vmatprep.subr.mxu0 0.0
        %802 = vmatpush1.msra.mxu0 0.0
        %803 = vmatprep.subr.mxu0 0.0
        %804 = vmatpush1.msra.mxu0 0.0
        %805 = vmatprep.subr.mxu0 0.0
        %806 = vmatpush1.msra.mxu0 0.0
        %807 = vmatprep.subr.mxu0 0.0
        %808 = vmatpush1.msra.mxu0 0.0
        %809 = vmatprep.subr.mxu0 0.0
        %810 = vmatpush1.msra.mxu0 0.0
        %811 = vmatprep.subr.mxu0 0.0
        %812 = vmatpush1.msra.mxu0 0.0
        %813 = vmatprep.subr.mxu0 0.0
        %814 = vmatpush1.msra.mxu0 0.0
        %815 = vmatprep.subr.mxu0 0.0
        %816 = vmatpush1.msra.mxu0 0.0
        %817 = vmatprep.subr.mxu0 0.0
        %818 = vmatpush1.msra.mxu0 0.0
        %819 = vmatprep.subr.mxu0 0.0
        %820 = vmatpush1.msra.mxu0 0.0
        %821 = vmatprep.subr.mxu0 0.0
        %822 = vmatpush1.msra.mxu0 0.0
        %823 = vmatprep.subr.mxu0 0.0
        %824 = vmatpush1.msra.mxu0 0.0
        %825 = vmatprep.subr.mxu0 0.0
        %826 = vmatpush1.msra.mxu0 0.0
        %827 = vmatprep.mubr.f32.mxu0 0.0
        %828 = vmatmul.mubr.f32.gmra.mrb[0].mxu0 %v761
        %v829 = vpop.f32.mrb[0].mxu0
        %v830 = vadd.f32 0.0, %v829
        %v831 = vpop.f32.mrb[0].mxu0
        %v832 = vadd.f32 0.0, %v831
        %833 = vdwg.mxu0
        %v834 = vadd.f32 %v517, %v830
        %v835 = vadd.f32 %v518, %v832
        %v836 = vld [vmem:[#allocation2] sm:$0x1]
        %838 = vset.pattern.permute.xlu0 0
        %839 = vperm.xlu0 %838, %v836
        %v840 = vpop.permute.xlu0 %839
        %v842 = vlaneseq
        %v843 = vshrl.u32 %v842, 7
        %v844 = vsub.s32 0, %v843
        %v845 = vrot.slane %v840, %v844
        %v846 = vadd.f32 %v834, %v845
        %v847 = vadd.f32 %v835, %v845
        %v848 = vxor.u32 %v846, 2147483648
        %v849 = vxor.u32 %v847, 2147483648
        %v850 = vmul.f32 %v848, 1.442695
        %v851 = vpow.pop %v850
        %v852 = vmul.f32 %v849, 1.442695
        %v853 = vpow.pop %v852
        %v854 = vadd.f32 %v851, 1.0
        %v855 = vadd.f32 %v853, 1.0
        %v856 = vrcp.pop %v854
        %v857 = vmul.f32 1.0, %v856
        %v858 = vrcp.pop %v855
        %v859 = vmul.f32 1.0, %v858
        %v862 = vcombine.low %v857, %v859
        %v864 = vunpack.c.l.s4 1966171168
        %v865 = vunpack.c.0.s8 %v864
        %v866 = vlaneseq
        %v867 = vshrl.u32 %v866, 7
        %v868 = vsub.s32 %v865, %v867
        %v869 = vrot.slane %v862, %v868
        %v871 = vunpack.c.l.s4 1966171168
        %v872 = vunpack.c.0.s8 %v871
        %v873 = vlaneseq
        %v874 = vshrl.u32 %v873, 7
        %v875 = vsub.s32 %v872, %v874
        %v876 = vrot.slane %v869, %v875
        %v878 = vlaneseq
        %vm879 = vcmp.ge.s32.totalorder %v878, 0
        %vm880 = vcmp.lt.s32.totalorder %v878, 256
        %vm881 = vmand %vm879, %vm880
        %882 = vst.msk [vmem:[%s352] sm:$0x3] %vm881, %v876
        %s883 = sand.u32 %s230, 1
        %s884 = scalar_lea.sflag [#allocation5], %s883
        %s885 = sand.u32 %s230, 1
        %s886 = smul.addr %s885, 2
        %s887 = scalar_lea.vmem [#allocation6], %s886
        // Predicated region
        $region61: #{tpu_custom_call.1} parent=55 // pred_check
          %p888 = pneg %p240
        $region62: #{tpu_custom_call.1} parent=55 // pred_check_branch
          %890 = sbr.rel (%p888) target = $region64
        $region63: #{tpu_custom_call.1} parent=55 // pred_region
          %s891 = smul.u32 2, %s28
          %s893 = ssub.s32 32, 32
          %894 = vsyncadd %s884, %s893
          %s895 = smul.addr %s891, 16
          %s896 = scalar_lea.hbm %s9, %s895
          %s898 = sshll.u32 %s887, 4
          %s899 = int_to_ptr.vmem [resolvable:$true] %s898
          %901 = dma.vmem_to_hbm [thread:$0]  %s899, 32, %s896, %s884
        $region64: #{tpu_custom_call.1} parent=55 // pred_fallthru
          _
      $region56: #{tpu_custom_call.1} parent=5 // pred_fallthru
        _
      %p902 = scmp.le.s32.totalorder 2, %s23
      // Predicated region
      $region65: #{tpu_custom_call.1} parent=5 // pred_check
        %p903 = pneg %p902
      $region66: #{tpu_custom_call.1} parent=5 // pred_check_branch
        %905 = sbr.rel (%p903) target = $region68
      $region67: #{tpu_custom_call.1} parent=5 // pred_region
        %s906 = ssub.s32 %s23, 2
        // Predicated region
        $region69: #{tpu_custom_call.1} parent=67 // pred_check
          %p907 = pneg %p246
        $region70: #{tpu_custom_call.1} parent=67 // pred_check_branch
          %909 = sbr.rel (%p907) target = $region72
        $region71: #{tpu_custom_call.1} parent=67 // pred_region
          %s910 = sand.u32 %s231, 1
          %s911 = scalar_lea.sflag [#allocation5], %s910
          %s912 = sand.u32 %s231, 1
          %s913 = smul.addr %s912, 2
          %s914 = scalar_lea.vmem [#allocation6], %s913
          %915 = dma.done %s911, 32
        $region72: #{tpu_custom_call.1} parent=67 // pred_fallthru
          _
      $region68: #{tpu_custom_call.1} parent=5 // pred_fallthru
        _
    $region6: #{tpu_custom_call.1} parent=1 // loop_footer
      %s27 = sadd.s32 1, %s23
    $region7: #{tpu_custom_call.1} parent=1 // loop_footer_branch
      %22 = sbr.rel target = $region3
    $region8: #{tpu_custom_call.1} parent=1 // loop_exit
      _
    %916 = vsyncpa [#allocation4], 1
    %s917 = scalar_lea.sflag [#allocation4], 1
    %918 = vsyncpa %s917, 1
    %919 = vsyncpa [#allocation5], 1
    %s920 = scalar_lea.sflag [#allocation5], 1
    %921 = vsyncpa %s920, 1

</llo_original>
